<compile_context>
chip_gen: v6e
topology: v6e:2x2x1
jax: 0.10.0
libtpu: 0.0.40
codegen_flags: <defaults>
</compile_context>

<pallas_src>
import functools
import math

import jax
import jax.numpy as jnp
from jax import lax
from jax.experimental import pallas as pl
from jax.experimental.pallas import tpu as pltpu


def _round_up(x, m):
    return ((x + m - 1) // m) * m


def _pick_tile(dim, target, align):
    """Largest multiple of `align` <= min(target, padded dim) that divides the padded
    dim -- guarantees no runtime padding for pre-aligned operands."""
    dim = _round_up(dim, align)
    n = dim // align
    for k in range(min(target, dim) // align, 0, -1):
        if n % k == 0:
            return k * align
    return align


# ----------------------------------------------------------------------------- #
# Tiled matmul + bias:  (M, K) f32  @  (K, N) bf16  + (1, N) f32  ->  (M, N) f32
# ----------------------------------------------------------------------------- #
def _matmul_bias_kernel(x_ref, w_ref, b_ref, o_ref, acc_ref):
    @pl.when(pl.program_id(2) == 0)
    def _():
        acc_ref[...] = jnp.zeros_like(acc_ref)

    # bf16 operands + f32 accumulation: the native MXU path on v5e/v6e/v7x.
    acc_ref[...] += jnp.dot(x_ref[...].astype(jnp.bfloat16), w_ref[...],
                            preferred_element_type=jnp.float32)

    @pl.when(pl.program_id(2) == pl.num_programs(2) - 1)
    def _():
        o_ref[...] = (acc_ref[...] + b_ref[...]).astype(o_ref.dtype)


def matmul_bias(x, w_bf16, b, *, tm_target=1024, tn_target=1024, tk_target=512):
    """Tiled, pipelined matmul+bias. tm covers all of M when M <= tm_target so the
    (large) weight is streamed from HBM exactly once (memory-bound vocab projection)."""
    M, K = x.shape
    Kw, N = w_bf16.shape
    assert K == Kw and b.shape == (1, N)

    tm = _pick_tile(M, tm_target, 8)
    tn = _pick_tile(N, tn_target, 128)
    tk = _pick_tile(K, tk_target, 128)
    Mp, Np, Kp = _round_up(M, tm), _round_up(N, tn), _round_up(K, tk)

    # No-op for the pre-padded operands produced by LSTMPallas; kept as a fallback.
    xp = jnp.pad(x, ((0, Mp - M), (0, Kp - K))) if (Mp, Kp) != (M, K) else x
    wp = jnp.pad(w_bf16, ((0, Kp - K), (0, Np - N))) if (Kp, Np) != (K, N) else w_bf16
    bp = jnp.pad(b, ((0, 0), (0, Np - N))) if Np != N else b

    grid = (Mp // tm, Np // tn, Kp // tk)
    out = pl.pallas_call(
        _matmul_bias_kernel,
        out_shape=jax.ShapeDtypeStruct((Mp, Np), jnp.float32),
        grid_spec=pltpu.PrefetchScalarGridSpec(
            num_scalar_prefetch=0,
            grid=grid,
            in_specs=[
                pl.BlockSpec((tm, tk), lambda i, j, k: (i, k)),
                pl.BlockSpec((tk, tn), lambda i, j, k: (k, j)),
                pl.BlockSpec((1, tn), lambda i, j, k: (0, j)),
            ],
            out_specs=pl.BlockSpec((tm, tn), lambda i, j, k: (i, j)),
            scratch_shapes=[pltpu.VMEM((tm, tn), jnp.float32)],
        ),
        compiler_params=pltpu.CompilerParams(
            dimension_semantics=("parallel", "parallel", "arbitrary"),
            vmem_limit_bytes=32 * 1024 * 1024),
    )(xp, wp, bp)
    return out[:M, :N] if (Mp, Np) != (M, N) else out


# ----------------------------------------------------------------------------- #
# LSTM recurrence (input projection already hoisted out).
# Grid = (batch tiles ["parallel"], time chunks ["arbitrary"]); h/c carried in
# resident output blocks per batch tile.
# ----------------------------------------------------------------------------- #
def _lstm_recurrence_kernel(gx_ref, whh_ref, h0_ref, c0_ref,
                            out_ref, hT_ref, cT_ref, *, total_T):
    Hp = hT_ref.shape[-1]
    Tc = gx_ref.shape[0]

    @pl.when(pl.program_id(1) == 0)
    def _():
        hT_ref[...] = h0_ref[...]
        cT_ref[...] = c0_ref[...]

    w_hh = whh_ref[...]                      # bf16, resident / single-buffered
    mask_tail = (total_T % Tc) != 0          # static Python bool
    t_base = pl.program_id(1) * Tc

    # TODO(synk): drive the MXU weight-stationary (matmul_push_rhs once per chunk,
    # matmul_acc_lhs per step) to avoid re-loading W_hh into the array every timestep.
    def step(t, carry):
        h, c = carry
        gates = gx_ref[t] + jnp.dot(h.astype(jnp.bfloat16), w_hh,
                                    preferred_element_type=jnp.float32)
        # PyTorch gate order: i, f, g, o (per-gate dim padded to a lane multiple).
        i_g = jax.nn.sigmoid(gates[:, 0:Hp])
        f_g = jax.nn.sigmoid(gates[:, Hp:2 * Hp])
        g_g = jnp.tanh(gates[:, 2 * Hp:3 * Hp])
        o_g = jax.nn.sigmoid(gates[:, 3 * Hp:4 * Hp])
        c_new = f_g * c + i_g * g_g
        h_new = o_g * jnp.tanh(c_new)
        if mask_tail:
            valid = (t_base + t) < total_T
            h_new = jnp.where(valid, h_new, h)
            c_new = jnp.where(valid, c_new, c)
        out_ref[t] = h_new
        return h_new, c_new

    h_fin, c_fin = lax.fori_loop(0, Tc, step, (hT_ref[...], cT_ref[...]),
                                 unroll=True)
    hT_ref[...] = h_fin
    cT_ref[...] = c_fin


_RECURRENCE_VMEM_BUDGET = 26 * 1024 * 1024   # fits inside the 32 MiB scoped limit


def _fit_time_chunk(Tc, tb, Hp, budget_bytes):
    """Shrink Tc until the recurrence buffers fit the VMEM budget (v7x-safe)."""
    fixed = Hp * (4 * Hp) * 2 + 6 * tb * Hp * 4   # W_hh (bf16, single-buf) + h/c blocks

    def bytes_at(tc):
        return fixed + 2 * tc * tb * (4 * Hp) * 4 + 2 * tc * tb * Hp * 4

    while Tc > 1 and bytes_at(Tc) > budget_bytes:
        Tc //= 2
    return max(Tc, 1)


def lstm_layer_recurrence(gates_x, h0, c0, w_hh_bf16, *,
                          time_chunk=16, num_batch_tiles=1):
    """gates_x: (T, Bp, 4*Hp) f32 (x@W_ih + b, hoisted); h0,c0: (Bp, Hp) f32;
    w_hh: (Hp, 4*Hp) bf16. Requires Bp % 8 == 0 and Hp % 128 == 0."""
    T, Bp, G = gates_x.shape
    Hp = h0.shape[-1]
    assert G == 4 * Hp and Bp % 8 == 0 and Hp % 128 == 0

    # Batch grid axis: lets v7x's 2 TensorCores split independent batch tiles.
    # Keep nb=1 on single-TC parts (default) to avoid re-streaming W_hh per tile.
    nb = num_batch_tiles
    if nb < 1 or Bp % nb != 0 or (Bp // nb) % 8 != 0:
        nb = 1
    tb = Bp // nb

    Tc = min(time_chunk, T)
    Tc = _fit_time_chunk(Tc, tb, Hp, _RECURRENCE_VMEM_BUDGET)
    Tp = _round_up(T, Tc)
    gx = jnp.pad(gates_x, ((0, Tp - T), (0, 0), (0, 0))) if Tp != T else gates_x

    grid = (nb, Tp // Tc)
    kernel = functools.partial(_lstm_recurrence_kernel, total_T=T)
    out_shape = (
        jax.ShapeDtypeStruct((Tp, Bp, Hp), jnp.float32),
        jax.ShapeDtypeStruct((Bp, Hp), jnp.float32),
        jax.ShapeDtypeStruct((Bp, Hp), jnp.float32),
    )

    def build(single_buffer_consts):
        const_kw = {"pipeline_mode": pl.Buffered(1)} if single_buffer_consts else {}
        grid_spec = pltpu.PrefetchScalarGridSpec(
            num_scalar_prefetch=0,
            grid=grid,
            in_specs=[
                pl.BlockSpec((Tc, tb, 4 * Hp), lambda b, t: (t, b, 0)),        # gates_x
                pl.BlockSpec((Hp, 4 * Hp), lambda b, t: (0, 0), **const_kw),   # W_hh
                pl.BlockSpec((tb, Hp), lambda b, t: (b, 0), **const_kw),       # h0
                pl.BlockSpec((tb, Hp), lambda b, t: (b, 0), **const_kw),       # c0
            ],
            out_specs=[
                pl.BlockSpec((Tc, tb, Hp), lambda b, t: (t, b, 0)),            # hidden seq
                pl.BlockSpec((tb, Hp), lambda b, t: (b, 0)),                   # h_T carry
                pl.BlockSpec((tb, Hp), lambda b, t: (b, 0)),                   # c_T carry
            ],
        )
        return pl.pallas_call(
            kernel,
            grid_spec=grid_spec,
            out_shape=out_shape,
            compiler_params=pltpu.CompilerParams(
                dimension_semantics=("parallel", "arbitrary"),
                vmem_limit_bytes=32 * 1024 * 1024),
        )

    try:
        out, hT, cT = build(True)(gx, w_hh_bf16, h0, c0)
    except Exception:
        # Fallback if single-buffering constant-index blocks is unsupported here.
        out, hT, cT = build(False)(gx, w_hh_bf16, h0, c0)

    return (out[:T] if Tp != T else out), hT, cT


# ----------------------------------------------------------------------------- #
# Model
# ----------------------------------------------------------------------------- #
class LSTMPallas:
    """JAX/Pallas port of LSTM.forward (embedding -> multi-layer LSTM -> linear).

    hidden_size may be overridden so the demo runs at small shapes while keeping the
    exact architecture of the reference module (which picks 650/1500 from lstm_type).
    All weights are stored pre-padded to (8,128)-aligned layouts, matmul weights in
    bfloat16 (f32 accumulation inside the kernels).
    """

    def __init__(self, embedding_size, vocab_size, num_layers=2,
                 lstm_type='medium', hidden_size=None, key=None):
        if key is None:
            key = jax.random.PRNGKey(0)
        self.embedding_size = embedding_size
        self.vocab_size = vocab_size
        self.num_layers = num_layers
        if lstm_type == 'medium':
            default_hidden, init_param = 650, 0.05
        elif lstm_type == 'large':
            default_hidden, init_param = 1500, 0.04
        else:
            raise ValueError(lstm_type)
        self.hidden_size = hidden_size if hidden_size is not None else default_hidden
        self.init_param = init_param
        H = self.hidden_size
        k_lstm = 1.0 / math.sqrt(H)

        self.Hp = _round_up(H, 128)
        self.Ep = _round_up(embedding_size, 128)
        self.Vp = _round_up(vocab_size, 128)

        keys = iter(jax.random.split(key, 4 + 4 * num_layers))

        # Embedding table, uniform(-init_param, init_param); pre-padded on features.
        emb = jax.random.uniform(next(keys), (vocab_size, embedding_size),
                                 jnp.float32, -init_param, init_param)
        self.embedding = jnp.pad(emb, ((0, 0), (0, self.Ep - embedding_size)))
        self._emb_ref = emb

        def pad_gates(a, rows_to):
            # (rows, 4H) -> (rows_to, 4*Hp), zero-padding each gate block separately.
            parts = jnp.split(a, 4, axis=-1)
            parts = [jnp.pad(p, ((0, rows_to - a.shape[0]), (0, self.Hp - H)))
                     for p in parts]
            return jnp.concatenate(parts, axis=-1)

        # LSTM parameters per layer; stored transposed for x @ W, padded, bf16.
        self.lstm_params = []   # (w_ih_padded bf16, w_hh_padded bf16, bias_padded f32)
        self._lstm_ref = []     # unpadded f32 (bf16-rounded) for the pure-JAX reference
        for l in range(num_layers):
            d_in = embedding_size if l == 0 else H
            d_in_p = self.Ep if l == 0 else self.Hp
            w_ih = jax.random.uniform(next(keys), (d_in, 4 * H), jnp.float32,
                                      -k_lstm, k_lstm)
            w_hh = jax.random.uniform(next(keys), (H, 4 * H), jnp.float32,
                                      -k_lstm, k_lstm)
            b_ih = jax.random.uniform(next(keys), (1, 4 * H), jnp.float32,
                                      -k_lstm, k_lstm)
            b_hh = jax.random.uniform(next(keys), (1, 4 * H), jnp.float32,
                                      -k_lstm, k_lstm)
            w_ih_r = w_ih.astype(jnp.bfloat16).astype(jnp.float32)
            w_hh_r = w_hh.astype(jnp.bfloat16).astype(jnp.float32)
            b = b_ih + b_hh
            self.lstm_params.append((
                pad_gates(w_ih_r, d_in_p).astype(jnp.bfloat16),
                pad_gates(w_hh_r, self.Hp).astype(jnp.bfloat16),
                pad_gates(b, 1),
            ))
            self._lstm_ref.append((w_ih_r, w_hh_r, b))

        # Output projection Linear(hidden, vocab); weight uniform(-init_param, init_param).
        w_out = jax.random.uniform(next(keys), (H, vocab_size), jnp.float32,
                                   -init_param, init_param)
        b_out = jax.random.uniform(next(keys), (1, vocab_size), jnp.float32,
                                   -k_lstm, k_lstm)
        w_out_r = w_out.astype(jnp.bfloat16).astype(jnp.float32)
        self.w_out = jnp.pad(w_out_r, ((0, self.Hp - H),
                                       (0, self.Vp - vocab_size))).astype(jnp.bfloat16)
        self.b_out = jnp.pad(b_out, ((0, 0), (0, self.Vp - vocab_size)))
        self._out_ref = (w_out_r, b_out)

    def init_hidden(self, batch_size):
        shape = (self.num_layers, batch_size, self.hidden_size)
        return jnp.zeros(shape, jnp.float32), jnp.zeros(shape, jnp.float32)

    def forward(self, inputs, hidden, *, time_chunk=16, num_batch_tiles=1):
        # TODO(synk): dropout on the embedding / between layers / on the output is
        # applied as identity (inference semantics).
        h0_all, c0_all = hidden                         # (num_layers, B, H)
        T, B = inputs.shape
        H, Hp = self.hidden_size, self.Hp
        Bp = _round_up(B, 8)

        tok = jnp.pad(inputs, ((0, 0), (0, Bp - B))) if Bp != B else inputs
        x = jnp.take(self.embedding, tok, axis=0)       # (T, Bp, Ep) gather (glue)

        h_fin, c_fin = [], []
        for l in range(self.num_layers):
            w_ih, w_hh, b = self.lstm_params[l]
            D = x.shape[-1]
            # Hoisted input projection: one big tiled matmul over the whole sequence.
            gx = matmul_bias(x.reshape(T * Bp, D), w_ih, b).reshape(T, Bp, 4 * Hp)
            h0p = jnp.zeros((Bp, Hp), jnp.float32).at[:B, :H].set(h0_all[l])
            c0p = jnp.zeros((Bp, Hp), jnp.float32).at[:B, :H].set(c0_all[l])
            out, hT, cT = lstm_layer_recurrence(
                gx, h0p, c0p, w_hh,
                time_chunk=time_chunk, num_batch_tiles=num_batch_tiles)
            h_fin.append(hT[:B, :H])
            c_fin.append(cT[:B, :H])
            x = out                                      # stays padded: (T, Bp, Hp)

        # output.view(-1, hidden_size) -> Linear(hidden, vocab)
        logits_p = matmul_bias(x.reshape(T * Bp, Hp), self.w_out, self.b_out)
        logits = logits_p.reshape(T, Bp, self.Vp)[:, :B, :self.vocab_size]
        logits = logits.reshape(T * B, self.vocab_size)

        return logits, (jnp.stack(h_fin, axis=0), jnp.stack(c_fin, axis=0))

    # Pure-JAX reference (same bf16-rounded weights, plain f32 math) for validation.
    def reference_forward(self, inputs, hidden):
        h0_all, c0_all = hidden
        x = jnp.take(self._emb_ref, inputs, axis=0)      # (T, B, E)
        h_fin, c_fin = [], []
        for l in range(self.num_layers):
            w_ih, w_hh, b = self._lstm_ref[l]

            def step(carry, x_t, w_ih=w_ih, w_hh=w_hh, b=b):
                h, c = carry
                gates = x_t @ w_ih + h @ w_hh + b
                i_g, f_g, g_g, o_g = jnp.split(gates, 4, axis=-1)
                c_new = jax.nn.sigmoid(f_g) * c + jax.nn.sigmoid(i_g) * jnp.tanh(g_g)
                h_new = jax.nn.sigmoid(o_g) * jnp.tanh(c_new)
                return (h_new, c_new), h_new

            (hT, cT), ys = lax.scan(step, (h0_all[l], c0_all[l]), x)
            h_fin.append(hT)
            c_fin.append(cT)
            x = ys
        w_out, b_out = self._out_ref
        logits = x.reshape(-1, self.hidden_size) @ w_out + b_out
        return logits, (jnp.stack(h_fin, axis=0), jnp.stack(c_fin, axis=0))


# ----------------------------------------------------------------------------- #
# Demo / checks
# ----------------------------------------------------------------------------- #
if __name__ == "__main__":
    def check(name, T, B, vocab, emb, hidden_dim, layers, time_chunk=16):
        key = jax.random.PRNGKey(0)
        k_param, k_tok = jax.random.split(key)
        model = LSTMPallas(embedding_size=emb, vocab_size=vocab, num_layers=layers,
                           lstm_type='medium', hidden_size=hidden_dim, key=k_param)
        inputs = jax.random.randint(k_tok, (T, B), 0, vocab, dtype=jnp.int32)
        state = model.init_hidden(batch_size=B)

        logits, (h_n, c_n) = model.forward(inputs, state, time_chunk=time_chunk)
        jax.block_until_ready((logits, h_n, c_n))

        assert logits.shape == (T * B, vocab)
        assert h_n.shape == (layers, B, hidden_dim)
        assert c_n.shape == (layers, B, hidden_dim)
        assert bool(jnp.all(jnp.isfinite(logits)))

        ref_logits, (ref_h, ref_c) = model.reference_forward(inputs, state)
        for got, ref in ((logits, ref_logits), (h_n, ref_h), (c_n, ref_c)):
            err = float(jnp.max(jnp.abs(got - ref)))
            assert err < 1e-2, f"{name}: max abs err {err}"

    # Aligned shapes (hidden multiple of 128, batch multiple of 8).
    check("aligned", T=16, B=8, vocab=512, emb=64, hidden_dim=128, layers=2)
    # Padding / tail path: hidden not a multiple of 128, batch not a multiple of 8,
    # sequence length not a multiple of the time chunk (exercises the tail mask).
    check("padded", T=19, B=5, vocab=300, emb=48, hidden_dim=100, layers=2,
          time_chunk=8)

    print("KERNEL_OK")
</pallas_src>

<mosaic_0001>
module attributes {stable_mosaic.version = 11 : i64} {
  func.func @_matmul_bias_kernel(%arg0: i32, %arg1: i32, %arg2: i32, %arg3: memref<128x128xf32, #tpu.memory_space<vmem>>, %arg4: memref<128x512xbf16, #tpu.memory_space<vmem>>, %arg5: memref<1x512xf32, #tpu.memory_space<vmem>>, %arg6: memref<128x512xf32, #tpu.memory_space<vmem>>, %arg7: memref<128x512xf32, #tpu.memory_space<vmem>>) attributes {dimension_semantics = [#tpu.dimension_semantics<parallel>, #tpu.dimension_semantics<parallel>, #tpu.dimension_semantics<arbitrary>], iteration_bounds = array<i64: 1, 1, 1>, scalar_prefetch = 0 : i64, scratch_operands = 1 : i64, tpu.core_type = #tpu.core_type<tc>, window_params = [{transform_indices = @transform_0, window_bounds = array<i64: 128, 128>}, {transform_indices = @transform_1, window_bounds = array<i64: 128, 512>}, {transform_indices = @transform_2, window_bounds = array<i64: 1, 512>}, {transform_indices = @transform_3, window_bounds = array<i64: 128, 512>}]} {
    %c0_i32 = arith.constant 0 : i32
    %0 = arith.cmpi eq, %arg2, %c0_i32 : i32
    %1 = arith.extui %0 : i1 to i32
    %c0_i32_0 = arith.constant 0 : i32
    %2 = arith.cmpi ne, %1, %c0_i32_0 : i32
    scf.if %2 {
      %cst_10 = arith.constant 0.000000e+00 : f32
      %13 = vector.broadcast %cst_10 : f32 to vector<128x512xf32>
      %c0_11 = arith.constant 0 : index
      %c0_12 = arith.constant 0 : index
      %14 = vector.load %arg7[%c0_11, %c0_12] : memref<128x512xf32, #tpu.memory_space<vmem>>, vector<128x512xf32>
      tpu.vector_store %arg7[%c0_11, %c0_12], %13 {strides = array<i32>} : memref<128x512xf32, #tpu.memory_space<vmem>>, vector<128x512xf32>,
    } else {
    }
    %c0 = arith.constant 0 : index
    %c0_1 = arith.constant 0 : index
    %3 = vector.load %arg7[%c0, %c0_1] : memref<128x512xf32, #tpu.memory_space<vmem>>, vector<128x512xf32>
    %c0_2 = arith.constant 0 : index
    %c0_3 = arith.constant 0 : index
    %4 = vector.load %arg3[%c0_2, %c0_3] : memref<128x128xf32, #tpu.memory_space<vmem>>, vector<128x128xf32>
    %5 = arith.truncf %4 : vector<128x128xf32> to vector<128x128xbf16>
    %c0_4 = arith.constant 0 : index
    %c0_5 = arith.constant 0 : index
    %6 = vector.load %arg4[%c0_4, %c0_5] : memref<128x512xbf16, #tpu.memory_space<vmem>>, vector<128x512xbf16>
    %cst = arith.constant dense<0.000000e+00> : vector<128x512xf32>
    %7 = tpu.matmul %5, %6, %cst {dimension_numbers = #tpu.dot_dimension_numbers<[1], [0], [0], [1], [0, 0, 1, 1], [], []>} : vector<128x128xbf16>, vector<128x512xbf16>, vector<128x512xf32> -> vector<128x512xf32>
    %8 = arith.addf %3, %7 : vector<128x512xf32>
    %c0_6 = arith.constant 0 : index
    %c0_7 = arith.constant 0 : index
    %9 = vector.load %arg7[%c0_6, %c0_7] : memref<128x512xf32, #tpu.memory_space<vmem>>, vector<128x512xf32>
    tpu.vector_store %arg7[%c0_6, %c0_7], %8 {strides = array<i32>} : memref<128x512xf32, #tpu.memory_space<vmem>>, vector<128x512xf32>,
    %c0_i32_8 = arith.constant 0 : i32
    %10 = arith.cmpi eq, %arg2, %c0_i32_8 : i32
    %11 = arith.extui %10 : i1 to i32
    %c0_i32_9 = arith.constant 0 : i32
    %12 = arith.cmpi ne, %11, %c0_i32_9 : i32
    scf.if %12 {
      %c0_10 = arith.constant 0 : index
      %c0_11 = arith.constant 0 : index
      %13 = vector.load %arg7[%c0_10, %c0_11] : memref<128x512xf32, #tpu.memory_space<vmem>>, vector<128x512xf32>
      %c0_12 = arith.constant 0 : index
      %c0_13 = arith.constant 0 : index
      %14 = vector.load %arg5[%c0_12, %c0_13] : memref<1x512xf32, #tpu.memory_space<vmem>>, vector<1x512xf32>
      %15 = vector.broadcast %14 : vector<1x512xf32> to vector<128x512xf32>
      %16 = arith.addf %13, %15 : vector<128x512xf32>
      %c0_14 = arith.constant 0 : index
      %c0_15 = arith.constant 0 : index
      %17 = vector.load %arg6[%c0_14, %c0_15] : memref<128x512xf32, #tpu.memory_space<vmem>>, vector<128x512xf32>
      tpu.vector_store %arg6[%c0_14, %c0_15], %16 {strides = array<i32>} : memref<128x512xf32, #tpu.memory_space<vmem>>, vector<128x512xf32>,
    } else {
    }
    return
  }
  func.func @transform_0(%arg0: i32, %arg1: i32, %arg2: i32) -> (i32, i32) {
    %c0_i32 = arith.constant 0 : i32
    return %arg0, %arg2 : i32, i32
  }
  func.func @transform_1(%arg0: i32, %arg1: i32, %arg2: i32) -> (i32, i32) {
    %c0_i32 = arith.constant 0 : i32
    return %arg2, %arg1 : i32, i32
  }
  func.func @transform_2(%arg0: i32, %arg1: i32, %arg2: i32) -> (i32, i32) {
    %c0_i32 = arith.constant 0 : i32
    %c0_i32_0 = arith.constant 0 : i32
    return %c0_i32, %arg1 : i32, i32
  }
  func.func @transform_3(%arg0: i32, %arg1: i32, %arg2: i32) -> (i32, i32) {
    %c0_i32 = arith.constant 0 : i32
    return %arg0, %arg1 : i32, i32
  }
}

</mosaic_0001>

<llo_original>
// kernel: tpu_custom_call.1
$region0: #{tpu_custom_call.1}
  #allocation0 [shape = 'u32[]', space=smem, size = 0x4, offset = 0x4, fixed_abs, tag = 'smem constant byte address 0x4 - core index']
  #allocation1 [shape = 'u32[144,128]{1,0:T(1,128)}', space=vmem, size = 0x12000, scoped, tag = 'internal scratch']
  #allocation2 [shape = 'f32[128,512]{1,0:T(8,128)}', space=vmem, size = 0x40000, scoped, tag = 'scratch operand']
  %s0 = inlined_call_operand.hbm [shape: f32[128,128], index: 0, kind: input, shape index: {}]
  %s1 = inlined_call_operand.hbm [shape: bf16[128,512], index: 1, kind: input, shape index: {}]
  %s2 = inlined_call_operand.hbm [shape: f32[1,512], index: 2, kind: input, shape index: {}]
  %s3 = inlined_call_operand.hbm [shape: f32[128,512], index: 3, kind: output, shape index: {}]
  %s4 = sld [smem:[#allocation0]]
  $region42: #{tpu_custom_call.1} parent=0
    _
  %s6 = ssub.s32 1, %s4
  %s7 = scalar_select 0, %s6, %s4
  $region1: #{tpu_custom_call.1} parent=0
    #allocation3 [shape = 'u8[65536]{0}', space=vmem, size = 0x10000, scoped, tag = 'input window, operand 0, single buffered']
    #allocation4 [shape = 's32[1]{0}', space=sflag, size = 0x4, scoped, tag = 'scoped memory for tpu_custom_call.1']
    #allocation5 [shape = 's32[1]{0}', space=sflag, size = 0x4, scoped, tag = 'scoped memory for tpu_custom_call.1']
    #allocation6 [shape = 'u8[131072]{0}', space=vmem, size = 0x20000, scoped, tag = 'input window, operand 1, single buffered']
    #allocation7 [shape = 's32[1]{0}', space=sflag, size = 0x4, scoped, tag = 'scoped memory for tpu_custom_call.1']
    #allocation8 [shape = 'u8[2048]{0}', space=vmem, size = 0x800, scoped, tag = 'input window, operand 2, single buffered']
    #allocation9 [shape = 'u8[262144]{0}', space=vmem, size = 0x40000, scoped, tag = 'output window, operand 0, single buffered']
    %8 = vsyncpa [#allocation4], 0
    %9 = vsyncpa [#allocation7], 0
    %10 = vsyncpa [#allocation5], 0
    // Predicated region
    $region2: #{tpu_custom_call.1} parent=1 // pred_check
      _
    $region3: #{tpu_custom_call.1} parent=1 // pred_check_branch
      %12 = sbr.rel (0) target = $region5
    $region4: #{tpu_custom_call.1} parent=1 // pred_region
      %s14 = ssub.s32 2048, 2048
      %15 = vsyncadd [#allocation4], %s14
      %s16 = sshll.u32 [#allocation3], 4
      %s17 = int_to_ptr.vmem [resolvable:$true] %s16
      %22 = dma.hbm_to_vmem [thread:$0]  %s0, 2048, %s17, [#allocation4], 128, 128, 8
    $region5: #{tpu_custom_call.1} parent=1 // pred_fallthru
      _
    // Predicated region
    $region6: #{tpu_custom_call.1} parent=1 // pred_check
      _
    $region7: #{tpu_custom_call.1} parent=1 // pred_check_branch
      %24 = sbr.rel (0) target = $region9
    $region8: #{tpu_custom_call.1} parent=1 // pred_region
      %s26 = ssub.s32 4096, 4096
      %27 = vsyncadd [#allocation7], %s26
      %s28 = sshll.u32 [#allocation6], 4
      %s29 = int_to_ptr.vmem [resolvable:$true] %s28
      %34 = dma.hbm_to_vmem [thread:$0]  %s1, 4096, %s29, [#allocation7], 256, 256, 16
    $region9: #{tpu_custom_call.1} parent=1 // pred_fallthru
      _
    // Predicated region
    $region10: #{tpu_custom_call.1} parent=1 // pred_check
      _
    $region11: #{tpu_custom_call.1} parent=1 // pred_check_branch
      %36 = sbr.rel (0) target = $region13
    $region12: #{tpu_custom_call.1} parent=1 // pred_region
      %s38 = ssub.s32 64, 64
      %39 = vsyncadd [#allocation7], %s38
      %s41 = sshll.u32 [#allocation8], 4
      %s42 = int_to_ptr.vmem [resolvable:$true] %s41
      %44 = dma.hbm_to_vmem [thread:$0]  %s2, 64, %s42, [#allocation7]
    $region13: #{tpu_custom_call.1} parent=1 // pred_fallthru
      _
    // Predicated region
    $region14: #{tpu_custom_call.1} parent=1 // pred_check
      _
    $region15: #{tpu_custom_call.1} parent=1 // pred_check_branch
      %46 = sbr.rel (0) target = $region17
    $region16: #{tpu_custom_call.1} parent=1 // pred_region
      %47 = dma.done [#allocation4], 2048
    $region17: #{tpu_custom_call.1} parent=1 // pred_fallthru
      _
    // Predicated region
    $region18: #{tpu_custom_call.1} parent=1 // pred_check
      _
    $region19: #{tpu_custom_call.1} parent=1 // pred_check_branch
      %49 = sbr.rel (0) target = $region21
    $region20: #{tpu_custom_call.1} parent=1 // pred_region
      %50 = dma.done [#allocation7], 4096
    $region21: #{tpu_custom_call.1} parent=1 // pred_fallthru
      _
    // Predicated region
    $region22: #{tpu_custom_call.1} parent=1 // pred_check
      _
    $region23: #{tpu_custom_call.1} parent=1 // pred_check_branch
      %52 = sbr.rel (0) target = $region25
    $region24: #{tpu_custom_call.1} parent=1 // pred_region
      %53 = dma.done [#allocation7], 64
    $region25: #{tpu_custom_call.1} parent=1 // pred_fallthru
      _
    %p55 = scmp.eq.s32.totalorder 0, 0
    // Predicated region
    $region26: #{tpu_custom_call.1} parent=1 // pred_check
      %p56 = pneg %p55
    $region27: #{tpu_custom_call.1} parent=1 // pred_check_branch
      %58 = sbr.rel (%p56) target = $region29
    $region28: #{tpu_custom_call.1} parent=1 // pred_region
      %59 = vst [vmem:[#allocation2] sm:$0xff] 0.0
      %60 = vst [vmem:[#allocation2 + $0x8] sm:$0xff] 0.0
      %61 = vst [vmem:[#allocation2 + $0x10] sm:$0xff] 0.0
      %62 = vst [vmem:[#allocation2 + $0x18] sm:$0xff] 0.0
      %63 = vst [vmem:[#allocation2 + $0x20] sm:$0xff] 0.0
      %64 = vst [vmem:[#allocation2 + $0x28] sm:$0xff] 0.0
      %65 = vst [vmem:[#allocation2 + $0x30] sm:$0xff] 0.0
      %66 = vst [vmem:[#allocation2 + $0x38] sm:$0xff] 0.0
      %67 = vst [vmem:[#allocation2 + $0x40] sm:$0xff] 0.0
      %68 = vst [vmem:[#allocation2 + $0x48] sm:$0xff] 0.0
      %69 = vst [vmem:[#allocation2 + $0x50] sm:$0xff] 0.0
      %70 = vst [vmem:[#allocation2 + $0x58] sm:$0xff] 0.0
      %71 = vst [vmem:[#allocation2 + $0x60] sm:$0xff] 0.0
      %72 = vst [vmem:[#allocation2 + $0x68] sm:$0xff] 0.0
      %73 = vst [vmem:[#allocation2 + $0x70] sm:$0xff] 0.0
      %74 = vst [vmem:[#allocation2 + $0x78] sm:$0xff] 0.0
      %75 = vst [vmem:[#allocation2 + $0x80] sm:$0xff] 0.0
      %76 = vst [vmem:[#allocation2 + $0x88] sm:$0xff] 0.0
      %77 = vst [vmem:[#allocation2 + $0x90] sm:$0xff] 0.0
      %78 = vst [vmem:[#allocation2 + $0x98] sm:$0xff] 0.0
      %79 = vst [vmem:[#allocation2 + $0xa0] sm:$0xff] 0.0
      %80 = vst [vmem:[#allocation2 + $0xa8] sm:$0xff] 0.0
      %81 = vst [vmem:[#allocation2 + $0xb0] sm:$0xff] 0.0
      %82 = vst [vmem:[#allocation2 + $0xb8] sm:$0xff] 0.0
      %83 = vst [vmem:[#allocation2 + $0xc0] sm:$0xff] 0.0
      %84 = vst [vmem:[#allocation2 + $0xc8] sm:$0xff] 0.0
      %85 = vst [vmem:[#allocation2 + $0xd0] sm:$0xff] 0.0
      %86 = vst [vmem:[#allocation2 + $0xd8] sm:$0xff] 0.0
      %87 = vst [vmem:[#allocation2 + $0xe0] sm:$0xff] 0.0
      %88 = vst [vmem:[#allocation2 + $0xe8] sm:$0xff] 0.0
      %89 = vst [vmem:[#allocation2 + $0xf0] sm:$0xff] 0.0
      %90 = vst [vmem:[#allocation2 + $0xf8] sm:$0xff] 0.0
      %91 = vst [vmem:[#allocation2 + $0x100] sm:$0xff] 0.0
      %92 = vst [vmem:[#allocation2 + $0x108] sm:$0xff] 0.0
      %93 = vst [vmem:[#allocation2 + $0x110] sm:$0xff] 0.0
      %94 = vst [vmem:[#allocation2 + $0x118] sm:$0xff] 0.0
      %95 = vst [vmem:[#allocation2 + $0x120] sm:$0xff] 0.0
      %96 = vst [vmem:[#allocation2 + $0x128] sm:$0xff] 0.0
      %97 = vst [vmem:[#allocation2 + $0x130] sm:$0xff] 0.0
      %98 = vst [vmem:[#allocation2 + $0x138] sm:$0xff] 0.0
      %99 = vst [vmem:[#allocation2 + $0x140] sm:$0xff] 0.0
      %100 = vst [vmem:[#allocation2 + $0x148] sm:$0xff] 0.0
      %101 = vst [vmem:[#allocation2 + $0x150] sm:$0xff] 0.0
      %102 = vst [vmem:[#allocation2 + $0x158] sm:$0xff] 0.0
      %103 = vst [vmem:[#allocation2 + $0x160] sm:$0xff] 0.0
      %104 = vst [vmem:[#allocation2 + $0x168] sm:$0xff] 0.0
      %105 = vst [vmem:[#allocation2 + $0x170] sm:$0xff] 0.0
      %106 = vst [vmem:[#allocation2 + $0x178] sm:$0xff] 0.0
      %107 = vst [vmem:[#allocation2 + $0x180] sm:$0xff] 0.0
      %108 = vst [vmem:[#allocation2 + $0x188] sm:$0xff] 0.0
      %109 = vst [vmem:[#allocation2 + $0x190] sm:$0xff] 0.0
      %110 = vst [vmem:[#allocation2 + $0x198] sm:$0xff] 0.0
      %111 = vst [vmem:[#allocation2 + $0x1a0] sm:$0xff] 0.0
      %112 = vst [vmem:[#allocation2 + $0x1a8] sm:$0xff] 0.0
      %113 = vst [vmem:[#allocation2 + $0x1b0] sm:$0xff] 0.0
      %114 = vst [vmem:[#allocation2 + $0x1b8] sm:$0xff] 0.0
      %115 = vst [vmem:[#allocation2 + $0x1c0] sm:$0xff] 0.0
      %116 = vst [vmem:[#allocation2 + $0x1c8] sm:$0xff] 0.0
      %117 = vst [vmem:[#allocation2 + $0x1d0] sm:$0xff] 0.0
      %118 = vst [vmem:[#allocation2 + $0x1d8] sm:$0xff] 0.0
      %119 = vst [vmem:[#allocation2 + $0x1e0] sm:$0xff] 0.0
      %120 = vst [vmem:[#allocation2 + $0x1e8] sm:$0xff] 0.0
      %121 = vst [vmem:[#allocation2 + $0x1f0] sm:$0xff] 0.0
      %122 = vst [vmem:[#allocation2 + $0x1f8] sm:$0xff] 0.0
    $region29: #{tpu_custom_call.1} parent=1 // pred_fallthru
      _
    %v123 = vld [vmem:[#allocation2] sm:$0xff]
    %v124 = vld [vmem:[#allocation2 + $0x8] sm:$0xff]
    %v125 = vld [vmem:[#allocation2 + $0x10] sm:$0xff]
    %v126 = vld [vmem:[#allocation2 + $0x18] sm:$0xff]
    %v127 = vld [vmem:[#allocation2 + $0x20] sm:$0xff]
    %v128 = vld [vmem:[#allocation2 + $0x28] sm:$0xff]
    %v129 = vld [vmem:[#allocation2 + $0x30] sm:$0xff]
    %v130 = vld [vmem:[#allocation2 + $0x38] sm:$0xff]
    %v131 = vld [vmem:[#allocation2 + $0x40] sm:$0xff]
    %v132 = vld [vmem:[#allocation2 + $0x48] sm:$0xff]
    %v133 = vld [vmem:[#allocation2 + $0x50] sm:$0xff]
    %v134 = vld [vmem:[#allocation2 + $0x58] sm:$0xff]
    %v135 = vld [vmem:[#allocation2 + $0x60] sm:$0xff]
    %v136 = vld [vmem:[#allocation2 + $0x68] sm:$0xff]
    %v137 = vld [vmem:[#allocation2 + $0x70] sm:$0xff]
    %v138 = vld [vmem:[#allocation2 + $0x78] sm:$0xff]
    %v139 = vld [vmem:[#allocation2 + $0x80] sm:$0xff]
    %v140 = vld [vmem:[#allocation2 + $0x88] sm:$0xff]
    %v141 = vld [vmem:[#allocation2 + $0x90] sm:$0xff]
    %v142 = vld [vmem:[#allocation2 + $0x98] sm:$0xff]
    %v143 = vld [vmem:[#allocation2 + $0xa0] sm:$0xff]
    %v144 = vld [vmem:[#allocation2 + $0xa8] sm:$0xff]
    %v145 = vld [vmem:[#allocation2 + $0xb0] sm:$0xff]
    %v146 = vld [vmem:[#allocation2 + $0xb8] sm:$0xff]
    %v147 = vld [vmem:[#allocation2 + $0xc0] sm:$0xff]
    %v148 = vld [vmem:[#allocation2 + $0xc8] sm:$0xff]
    %v149 = vld [vmem:[#allocation2 + $0xd0] sm:$0xff]
    %v150 = vld [vmem:[#allocation2 + $0xd8] sm:$0xff]
    %v151 = vld [vmem:[#allocation2 + $0xe0] sm:$0xff]
    %v152 = vld [vmem:[#allocation2 + $0xe8] sm:$0xff]
    %v153 = vld [vmem:[#allocation2 + $0xf0] sm:$0xff]
    %v154 = vld [vmem:[#allocation2 + $0xf8] sm:$0xff]
    %v155 = vld [vmem:[#allocation2 + $0x100] sm:$0xff]
    %v156 = vld [vmem:[#allocation2 + $0x108] sm:$0xff]
    %v157 = vld [vmem:[#allocation2 + $0x110] sm:$0xff]
    %v158 = vld [vmem:[#allocation2 + $0x118] sm:$0xff]
    %v159 = vld [vmem:[#allocation2 + $0x120] sm:$0xff]
    %v160 = vld [vmem:[#allocation2 + $0x128] sm:$0xff]
    %v161 = vld [vmem:[#allocation2 + $0x130] sm:$0xff]
    %v162 = vld [vmem:[#allocation2 + $0x138] sm:$0xff]
    %v163 = vld [vmem:[#allocation2 + $0x140] sm:$0xff]
    %v164 = vld [vmem:[#allocation2 + $0x148] sm:$0xff]
    %v165 = vld [vmem:[#allocation2 + $0x150] sm:$0xff]
    %v166 = vld [vmem:[#allocation2 + $0x158] sm:$0xff]
    %v167 = vld [vmem:[#allocation2 + $0x160] sm:$0xff]
    %v168 = vld [vmem:[#allocation2 + $0x168] sm:$0xff]
    %v169 = vld [vmem:[#allocation2 + $0x170] sm:$0xff]
    %v170 = vld [vmem:[#allocation2 + $0x178] sm:$0xff]
    %v171 = vld [vmem:[#allocation2 + $0x180] sm:$0xff]
    %v172 = vld [vmem:[#allocation2 + $0x188] sm:$0xff]
    %v173 = vld [vmem:[#allocation2 + $0x190] sm:$0xff]
    %v174 = vld [vmem:[#allocation2 + $0x198] sm:$0xff]
    %v175 = vld [vmem:[#allocation2 + $0x1a0] sm:$0xff]
    %v176 = vld [vmem:[#allocation2 + $0x1a8] sm:$0xff]
    %v177 = vld [vmem:[#allocation2 + $0x1b0] sm:$0xff]
    %v178 = vld [vmem:[#allocation2 + $0x1b8] sm:$0xff]
    %v179 = vld [vmem:[#allocation2 + $0x1c0] sm:$0xff]
    %v180 = vld [vmem:[#allocation2 + $0x1c8] sm:$0xff]
    %v181 = vld [vmem:[#allocation2 + $0x1d0] sm:$0xff]
    %v182 = vld [vmem:[#allocation2 + $0x1d8] sm:$0xff]
    %v183 = vld [vmem:[#allocation2 + $0x1e0] sm:$0xff]
    %v184 = vld [vmem:[#allocation2 + $0x1e8] sm:$0xff]
    %v185 = vld [vmem:[#allocation2 + $0x1f0] sm:$0xff]
    %v186 = vld [vmem:[#allocation2 + $0x1f8] sm:$0xff]
    %v187 = vld [vmem:[#allocation3] sm:$0xff]
    %v188 = vld [vmem:[#allocation3 + $0x8] sm:$0xff]
    %v189 = vld [vmem:[#allocation3 + $0x10] sm:$0xff]
    %v190 = vld [vmem:[#allocation3 + $0x18] sm:$0xff]
    %v191 = vld [vmem:[#allocation3 + $0x20] sm:$0xff]
    %v192 = vld [vmem:[#allocation3 + $0x28] sm:$0xff]
    %v193 = vld [vmem:[#allocation3 + $0x30] sm:$0xff]
    %v194 = vld [vmem:[#allocation3 + $0x38] sm:$0xff]
    %v195 = vld [vmem:[#allocation3 + $0x40] sm:$0xff]
    %v196 = vld [vmem:[#allocation3 + $0x48] sm:$0xff]
    %v197 = vld [vmem:[#allocation3 + $0x50] sm:$0xff]
    %v198 = vld [vmem:[#allocation3 + $0x58] sm:$0xff]
    %v199 = vld [vmem:[#allocation3 + $0x60] sm:$0xff]
    %v200 = vld [vmem:[#allocation3 + $0x68] sm:$0xff]
    %v201 = vld [vmem:[#allocation3 + $0x70] sm:$0xff]
    %v202 = vld [vmem:[#allocation3 + $0x78] sm:$0xff]
    %v203 = vpack.c.bf16 %v188, %v187
    %v204 = vpack.c.bf16 %v190, %v189
    %v205 = vpack.c.bf16 %v192, %v191
    %v206 = vpack.c.bf16 %v194, %v193
    %v207 = vpack.c.bf16 %v196, %v195
    %v208 = vpack.c.bf16 %v198, %v197
    %v209 = vpack.c.bf16 %v200, %v199
    %v210 = vpack.c.bf16 %v202, %v201
    %v211 = vld [vmem:[#allocation6] sm:$0xff]
    %v212 = vld [vmem:[#allocation6 + $0x8] sm:$0xff]
    %v213 = vld [vmem:[#allocation6 + $0x10] sm:$0xff]
    %v214 = vld [vmem:[#allocation6 + $0x18] sm:$0xff]
    %v215 = vld [vmem:[#allocation6 + $0x20] sm:$0xff]
    %v216 = vld [vmem:[#allocation6 + $0x28] sm:$0xff]
    %v217 = vld [vmem:[#allocation6 + $0x30] sm:$0xff]
    %v218 = vld [vmem:[#allocation6 + $0x38] sm:$0xff]
    %v219 = vld [vmem:[#allocation6 + $0x40] sm:$0xff]
    %v220 = vld [vmem:[#allocation6 + $0x48] sm:$0xff]
    %v221 = vld [vmem:[#allocation6 + $0x50] sm:$0xff]
    %v222 = vld [vmem:[#allocation6 + $0x58] sm:$0xff]
    %v223 = vld [vmem:[#allocation6 + $0x60] sm:$0xff]
    %v224 = vld [vmem:[#allocation6 + $0x68] sm:$0xff]
    %v225 = vld [vmem:[#allocation6 + $0x70] sm:$0xff]
    %v226 = vld [vmem:[#allocation6 + $0x78] sm:$0xff]
    %v227 = vld [vmem:[#allocation6 + $0x80] sm:$0xff]
    %v228 = vld [vmem:[#allocation6 + $0x88] sm:$0xff]
    %v229 = vld [vmem:[#allocation6 + $0x90] sm:$0xff]
    %v230 = vld [vmem:[#allocation6 + $0x98] sm:$0xff]
    %v231 = vld [vmem:[#allocation6 + $0xa0] sm:$0xff]
    %v232 = vld [vmem:[#allocation6 + $0xa8] sm:$0xff]
    %v233 = vld [vmem:[#allocation6 + $0xb0] sm:$0xff]
    %v234 = vld [vmem:[#allocation6 + $0xb8] sm:$0xff]
    %v235 = vld [vmem:[#allocation6 + $0xc0] sm:$0xff]
    %v236 = vld [vmem:[#allocation6 + $0xc8] sm:$0xff]
    %v237 = vld [vmem:[#allocation6 + $0xd0] sm:$0xff]
    %v238 = vld [vmem:[#allocation6 + $0xd8] sm:$0xff]
    %v239 = vld [vmem:[#allocation6 + $0xe0] sm:$0xff]
    %v240 = vld [vmem:[#allocation6 + $0xe8] sm:$0xff]
    %v241 = vld [vmem:[#allocation6 + $0xf0] sm:$0xff]
    %v242 = vld [vmem:[#allocation6 + $0xf8] sm:$0xff]
    %v275 = vunpack.c.l.b16 %v211
    %v276 = vunpack.c.h.b16 %v211
    %v277 = vunpack.c.l.b16 %v212
    %v278 = vunpack.c.h.b16 %v212
    %v279 = vunpack.c.l.b16 %v213
    %v280 = vunpack.c.h.b16 %v213
    %v281 = vunpack.c.l.b16 %v214
    %v282 = vunpack.c.h.b16 %v214
    %v283 = vunpack.c.l.b16 %v215
    %v284 = vunpack.c.h.b16 %v215
    %v285 = vunpack.c.l.b16 %v216
    %v286 = vunpack.c.h.b16 %v216
    %v287 = vunpack.c.l.b16 %v217
    %v288 = vunpack.c.h.b16 %v217
    %v289 = vunpack.c.l.b16 %v218
    %v290 = vunpack.c.h.b16 %v218
    %v291 = vunpack.c.l.b16 %v219
    %v292 = vunpack.c.h.b16 %v219
    %v293 = vunpack.c.l.b16 %v220
    %v294 = vunpack.c.h.b16 %v220
    %v295 = vunpack.c.l.b16 %v221
    %v296 = vunpack.c.h.b16 %v221
    %v297 = vunpack.c.l.b16 %v222
    %v298 = vunpack.c.h.b16 %v222
    %v299 = vunpack.c.l.b16 %v223
    %v300 = vunpack.c.h.b16 %v223
    %v301 = vunpack.c.l.b16 %v224
    %v302 = vunpack.c.h.b16 %v224
    %v303 = vunpack.c.l.b16 %v225
    %v304 = vunpack.c.h.b16 %v225
    %v305 = vunpack.c.l.b16 %v226
    %v306 = vunpack.c.h.b16 %v226
    %v307 = vunpack.c.l.b16 %v227
    %v308 = vunpack.c.h.b16 %v227
    %v309 = vunpack.c.l.b16 %v228
    %v310 = vunpack.c.h.b16 %v228
    %v311 = vunpack.c.l.b16 %v229
    %v312 = vunpack.c.h.b16 %v229
    %v313 = vunpack.c.l.b16 %v230
    %v314 = vunpack.c.h.b16 %v230
    %v315 = vunpack.c.l.b16 %v231
    %v316 = vunpack.c.h.b16 %v231
    %v317 = vunpack.c.l.b16 %v232
    %v318 = vunpack.c.h.b16 %v232
    %v319 = vunpack.c.l.b16 %v233
    %v320 = vunpack.c.h.b16 %v233
    %v321 = vunpack.c.l.b16 %v234
    %v322 = vunpack.c.h.b16 %v234
    %v323 = vunpack.c.l.b16 %v235
    %v324 = vunpack.c.h.b16 %v235
    %v325 = vunpack.c.l.b16 %v236
    %v326 = vunpack.c.h.b16 %v236
    %v327 = vunpack.c.l.b16 %v237
    %v328 = vunpack.c.h.b16 %v237
    %v329 = vunpack.c.l.b16 %v238
    %v330 = vunpack.c.h.b16 %v238
    %v331 = vunpack.c.l.b16 %v239
    %v332 = vunpack.c.h.b16 %v239
    %v333 = vunpack.c.l.b16 %v240
    %v334 = vunpack.c.h.b16 %v240
    %v335 = vunpack.c.l.b16 %v241
    %v336 = vunpack.c.h.b16 %v241
    %v337 = vunpack.c.l.b16 %v242
    %v338 = vunpack.c.h.b16 %v242
    %v339 = vpack.c.b16 %v279, %v275
    %v340 = vpack.c.b16 %v280, %v276
    %v341 = vpack.c.b16 %v281, %v277
    %v342 = vpack.c.b16 %v282, %v278
    %v343 = vpack.c.b16 %v287, %v283
    %v344 = vpack.c.b16 %v288, %v284
    %v345 = vpack.c.b16 %v289, %v285
    %v346 = vpack.c.b16 %v290, %v286
    %v347 = vpack.c.b16 %v295, %v291
    %v348 = vpack.c.b16 %v296, %v292
    %v349 = vpack.c.b16 %v297, %v293
    %v350 = vpack.c.b16 %v298, %v294
    %v351 = vpack.c.b16 %v303, %v299
    %v352 = vpack.c.b16 %v304, %v300
    %v353 = vpack.c.b16 %v305, %v301
    %v354 = vpack.c.b16 %v306, %v302
    %v355 = vpack.c.b16 %v311, %v307
    %v356 = vpack.c.b16 %v312, %v308
    %v357 = vpack.c.b16 %v313, %v309
    %v358 = vpack.c.b16 %v314, %v310
    %v359 = vpack.c.b16 %v319, %v315
    %v360 = vpack.c.b16 %v320, %v316
    %v361 = vpack.c.b16 %v321, %v317
    %v362 = vpack.c.b16 %v322, %v318
    %v363 = vpack.c.b16 %v327, %v323
    %v364 = vpack.c.b16 %v328, %v324
    %v365 = vpack.c.b16 %v329, %v325
    %v366 = vpack.c.b16 %v330, %v326
    %v367 = vpack.c.b16 %v335, %v331
    %v368 = vpack.c.b16 %v336, %v332
    %v369 = vpack.c.b16 %v337, %v333
    %v370 = vpack.c.b16 %v338, %v334
    %403 = vmatprep.subr.bf16.mxu0 %v368
    %404 = vmatpush1.bf16.msra.mxu0 %v367
    %405 = vmatprep.subr.bf16.mxu0 %v364
    %406 = vmatpush1.bf16.msra.mxu0 %v363
    %407 = vmatprep.subr.bf16.mxu0 %v360
    %408 = vmatpush1.bf16.msra.mxu0 %v359
    %409 = vmatprep.subr.bf16.mxu0 %v356
    %410 = vmatpush1.bf16.msra.mxu0 %v355
    %411 = vmatprep.subr.bf16.mxu0 %v352
    %412 = vmatpush1.bf16.msra.mxu0 %v351
    %413 = vmatprep.subr.bf16.mxu0 %v348
    %414 = vmatpush1.bf16.msra.mxu0 %v347
    %415 = vmatprep.subr.bf16.mxu0 %v344
    %416 = vmatpush1.bf16.msra.mxu0 %v343
    %417 = vmatprep.subr.bf16.mxu0 %v340
    %418 = vmatpush1.bf16.msra.mxu0 %v339
    %419 = vmatprep.subr.bf16.mxu0 0
    %420 = vmatpush2.bf16.msra.mxu0 0
    %421 = vmatprep.subr.bf16.mxu0 0
    %422 = vmatpush2.bf16.msra.mxu0 0
    %423 = vmatprep.subr.bf16.mxu0 0
    %424 = vmatpush2.bf16.msra.mxu0 0
    %425 = vmatprep.subr.bf16.mxu0 0
    %426 = vmatpush2.bf16.msra.mxu0 0
    %427 = vmatprep.subr.bf16.mxu0 0
    %428 = vmatpush2.bf16.msra.mxu0 0
    %429 = vmatprep.subr.bf16.mxu0 0
    %430 = vmatpush2.bf16.msra.mxu0 0
    %431 = vmatprep.subr.bf16.mxu0 0
    %432 = vmatpush2.bf16.msra.mxu0 0
    %433 = vmatprep.subr.bf16.mxu0 0
    %434 = vmatpush2.bf16.msra.mxu0 0
    %435 = vmatprep.mubr.bf16.mxu0 0
    %436 = vmatmul.mubr.bf16.gmra.mxu0 %v203
    %v437 = vpop.f32.mrf.mxu0
    %v438 = vadd.f32 0.0, %v437
    %v439 = vpop.f32.mrf.mxu0
    %v440 = vadd.f32 0.0, %v439
    %v441 = vpop.f32.mrf.mxu0
    %v442 = vadd.f32 0.0, %v441
    %v443 = vpop.f32.mrf.mxu0
    %v444 = vadd.f32 0.0, %v443
    %445 = vmatprep.mubr.bf16.mxu0 0
    %446 = vmatmul.mubr.bf16.gmra.mxu0 %v204
    %v447 = vpop.f32.mrf.mxu0
    %v448 = vadd.f32 0.0, %v447
    %v449 = vpop.f32.mrf.mxu0
    %v450 = vadd.f32 0.0, %v449
    %v451 = vpop.f32.mrf.mxu0
    %v452 = vadd.f32 0.0, %v451
    %v453 = vpop.f32.mrf.mxu0
    %v454 = vadd.f32 0.0, %v453
    %455 = vmatprep.mubr.bf16.mxu0 0
    %456 = vmatmul.mubr.bf16.gmra.mxu0 %v205
    %v457 = vpop.f32.mrf.mxu0
    %v458 = vadd.f32 0.0, %v457
    %v459 = vpop.f32.mrf.mxu0
    %v460 = vadd.f32 0.0, %v459
    %v461 = vpop.f32.mrf.mxu0
    %v462 = vadd.f32 0.0, %v461
    %v463 = vpop.f32.mrf.mxu0
    %v464 = vadd.f32 0.0, %v463
    %465 = vmatprep.mubr.bf16.mxu0 0
    %466 = vmatmul.mubr.bf16.gmra.mxu0 %v206
    %v467 = vpop.f32.mrf.mxu0
    %v468 = vadd.f32 0.0, %v467
    %v469 = vpop.f32.mrf.mxu0
    %v470 = vadd.f32 0.0, %v469
    %v471 = vpop.f32.mrf.mxu0
    %v472 = vadd.f32 0.0, %v471
    %v473 = vpop.f32.mrf.mxu0
    %v474 = vadd.f32 0.0, %v473
    %475 = vmatprep.mubr.bf16.mxu0 0
    %476 = vmatmul.mubr.bf16.gmra.mxu0 %v207
    %v477 = vpop.f32.mrf.mxu0
    %v478 = vadd.f32 0.0, %v477
    %v479 = vpop.f32.mrf.mxu0
    %v480 = vadd.f32 0.0, %v479
    %v481 = vpop.f32.mrf.mxu0
    %v482 = vadd.f32 0.0, %v481
    %v483 = vpop.f32.mrf.mxu0
    %v484 = vadd.f32 0.0, %v483
    %485 = vmatprep.mubr.bf16.mxu0 0
    %486 = vmatmul.mubr.bf16.gmra.mxu0 %v208
    %v487 = vpop.f32.mrf.mxu0
    %v488 = vadd.f32 0.0, %v487
    %v489 = vpop.f32.mrf.mxu0
    %v490 = vadd.f32 0.0, %v489
    %v491 = vpop.f32.mrf.mxu0
    %v492 = vadd.f32 0.0, %v491
    %v493 = vpop.f32.mrf.mxu0
    %v494 = vadd.f32 0.0, %v493
    %495 = vmatprep.mubr.bf16.mxu0 0
    %496 = vmatmul.mubr.bf16.gmra.mxu0 %v209
    %v497 = vpop.f32.mrf.mxu0
    %v498 = vadd.f32 0.0, %v497
    %v499 = vpop.f32.mrf.mxu0
    %v500 = vadd.f32 0.0, %v499
    %v501 = vpop.f32.mrf.mxu0
    %v502 = vadd.f32 0.0, %v501
    %v503 = vpop.f32.mrf.mxu0
    %v504 = vadd.f32 0.0, %v503
    %505 = vmatprep.mubr.bf16.mxu0 0
    %506 = vmatmul.mubr.bf16.gmra.mxu0 %v210
    %v507 = vpop.f32.mrf.mxu0
    %v508 = vadd.f32 0.0, %v507
    %v509 = vpop.f32.mrf.mxu0
    %v510 = vadd.f32 0.0, %v509
    %v511 = vpop.f32.mrf.mxu0
    %v512 = vadd.f32 0.0, %v511
    %v513 = vpop.f32.mrf.mxu0
    %v514 = vadd.f32 0.0, %v513
    %515 = vdwg.mxu0
    %516 = vmatprep.subr.bf16.mxu0 %v370
    %517 = vmatpush1.bf16.msra.mxu0 %v369
    %518 = vmatprep.subr.bf16.mxu0 %v366
    %519 = vmatpush1.bf16.msra.mxu0 %v365
    %520 = vmatprep.subr.bf16.mxu0 %v362
    %521 = vmatpush1.bf16.msra.mxu0 %v361
    %522 = vmatprep.subr.bf16.mxu0 %v358
    %523 = vmatpush1.bf16.msra.mxu0 %v357
    %524 = vmatprep.subr.bf16.mxu0 %v354
    %525 = vmatpush1.bf16.msra.mxu0 %v353
    %526 = vmatprep.subr.bf16.mxu0 %v350
    %527 = vmatpush1.bf16.msra.mxu0 %v349
    %528 = vmatprep.subr.bf16.mxu0 %v346
    %529 = vmatpush1.bf16.msra.mxu0 %v345
    %530 = vmatprep.subr.bf16.mxu0 %v342
    %531 = vmatpush1.bf16.msra.mxu0 %v341
    %532 = vmatprep.subr.bf16.mxu0 0
    %533 = vmatpush2.bf16.msra.mxu0 0
    %534 = vmatprep.subr.bf16.mxu0 0
    %535 = vmatpush2.bf16.msra.mxu0 0
    %536 = vmatprep.subr.bf16.mxu0 0
    %537 = vmatpush2.bf16.msra.mxu0 0
    %538 = vmatprep.subr.bf16.mxu0 0
    %539 = vmatpush2.bf16.msra.mxu0 0
    %540 = vmatprep.subr.bf16.mxu0 0
    %541 = vmatpush2.bf16.msra.mxu0 0
    %542 = vmatprep.subr.bf16.mxu0 0
    %543 = vmatpush2.bf16.msra.mxu0 0
    %544 = vmatprep.subr.bf16.mxu0 0
    %545 = vmatpush2.bf16.msra.mxu0 0
    %546 = vmatprep.subr.bf16.mxu0 0
    %547 = vmatpush2.bf16.msra.mxu0 0
    %548 = vmatprep.mubr.bf16.mxu0 0
    %549 = vmatmul.mubr.bf16.gmra.mxu0 %v203
    %v550 = vpop.f32.mrf.mxu0
    %v551 = vadd.f32 0.0, %v550
    %v552 = vpop.f32.mrf.mxu0
    %v553 = vadd.f32 0.0, %v552
    %v554 = vpop.f32.mrf.mxu0
    %v555 = vadd.f32 0.0, %v554
    %v556 = vpop.f32.mrf.mxu0
    %v557 = vadd.f32 0.0, %v556
    %558 = vmatprep.mubr.bf16.mxu0 0
    %559 = vmatmul.mubr.bf16.gmra.mxu0 %v204
    %v560 = vpop.f32.mrf.mxu0
    %v561 = vadd.f32 0.0, %v560
    %v562 = vpop.f32.mrf.mxu0
    %v563 = vadd.f32 0.0, %v562
    %v564 = vpop.f32.mrf.mxu0
    %v565 = vadd.f32 0.0, %v564
    %v566 = vpop.f32.mrf.mxu0
    %v567 = vadd.f32 0.0, %v566
    %568 = vmatprep.mubr.bf16.mxu0 0
    %569 = vmatmul.mubr.bf16.gmra.mxu0 %v205
    %v570 = vpop.f32.mrf.mxu0
    %v571 = vadd.f32 0.0, %v570
    %v572 = vpop.f32.mrf.mxu0
    %v573 = vadd.f32 0.0, %v572
    %v574 = vpop.f32.mrf.mxu0
    %v575 = vadd.f32 0.0, %v574
    %v576 = vpop.f32.mrf.mxu0
    %v577 = vadd.f32 0.0, %v576
    %578 = vmatprep.mubr.bf16.mxu0 0
    %579 = vmatmul.mubr.bf16.gmra.mxu0 %v206
    %v580 = vpop.f32.mrf.mxu0
    %v581 = vadd.f32 0.0, %v580
    %v582 = vpop.f32.mrf.mxu0
    %v583 = vadd.f32 0.0, %v582
    %v584 = vpop.f32.mrf.mxu0
    %v585 = vadd.f32 0.0, %v584
    %v586 = vpop.f32.mrf.mxu0
    %v587 = vadd.f32 0.0, %v586
    %588 = vmatprep.mubr.bf16.mxu0 0
    %589 = vmatmul.mubr.bf16.gmra.mxu0 %v207
    %v590 = vpop.f32.mrf.mxu0
    %v591 = vadd.f32 0.0, %v590
    %v592 = vpop.f32.mrf.mxu0
    %v593 = vadd.f32 0.0, %v592
    %v594 = vpop.f32.mrf.mxu0
    %v595 = vadd.f32 0.0, %v594
    %v596 = vpop.f32.mrf.mxu0
    %v597 = vadd.f32 0.0, %v596
    %598 = vmatprep.mubr.bf16.mxu0 0
    %599 = vmatmul.mubr.bf16.gmra.mxu0 %v208
    %v600 = vpop.f32.mrf.mxu0
    %v601 = vadd.f32 0.0, %v600
    %v602 = vpop.f32.mrf.mxu0
    %v603 = vadd.f32 0.0, %v602
    %v604 = vpop.f32.mrf.mxu0
    %v605 = vadd.f32 0.0, %v604
    %v606 = vpop.f32.mrf.mxu0
    %v607 = vadd.f32 0.0, %v606
    %608 = vmatprep.mubr.bf16.mxu0 0
    %609 = vmatmul.mubr.bf16.gmra.mxu0 %v209
    %v610 = vpop.f32.mrf.mxu0
    %v611 = vadd.f32 0.0, %v610
    %v612 = vpop.f32.mrf.mxu0
    %v613 = vadd.f32 0.0, %v612
    %v614 = vpop.f32.mrf.mxu0
    %v615 = vadd.f32 0.0, %v614
    %v616 = vpop.f32.mrf.mxu0
    %v617 = vadd.f32 0.0, %v616
    %618 = vmatprep.mubr.bf16.mxu0 0
    %619 = vmatmul.mubr.bf16.gmra.mxu0 %v210
    %v620 = vpop.f32.mrf.mxu0
    %v621 = vadd.f32 0.0, %v620
    %v622 = vpop.f32.mrf.mxu0
    %v623 = vadd.f32 0.0, %v622
    %v624 = vpop.f32.mrf.mxu0
    %v625 = vadd.f32 0.0, %v624
    %v626 = vpop.f32.mrf.mxu0
    %v627 = vadd.f32 0.0, %v626
    %628 = vdwg.mxu0
    %v629 = vadd.f32 %v123, %v438
    %v630 = vadd.f32 %v124, %v440
    %v631 = vadd.f32 %v125, %v551
    %v632 = vadd.f32 %v126, %v553
    %v633 = vadd.f32 %v127, %v442
    %v634 = vadd.f32 %v128, %v444
    %v635 = vadd.f32 %v129, %v555
    %v636 = vadd.f32 %v130, %v557
    %v637 = vadd.f32 %v131, %v448
    %v638 = vadd.f32 %v132, %v450
    %v639 = vadd.f32 %v133, %v561
    %v640 = vadd.f32 %v134, %v563
    %v641 = vadd.f32 %v135, %v452
    %v642 = vadd.f32 %v136, %v454
    %v643 = vadd.f32 %v137, %v565
    %v644 = vadd.f32 %v138, %v567
    %v645 = vadd.f32 %v139, %v458
    %v646 = vadd.f32 %v140, %v460
    %v647 = vadd.f32 %v141, %v571
    %v648 = vadd.f32 %v142, %v573
    %v649 = vadd.f32 %v143, %v462
    %v650 = vadd.f32 %v144, %v464
    %v651 = vadd.f32 %v145, %v575
    %v652 = vadd.f32 %v146, %v577
    %v653 = vadd.f32 %v147, %v468
    %v654 = vadd.f32 %v148, %v470
    %v655 = vadd.f32 %v149, %v581
    %v656 = vadd.f32 %v150, %v583
    %v657 = vadd.f32 %v151, %v472
    %v658 = vadd.f32 %v152, %v474
    %v659 = vadd.f32 %v153, %v585
    %v660 = vadd.f32 %v154, %v587
    %v661 = vadd.f32 %v155, %v478
    %v662 = vadd.f32 %v156, %v480
    %v663 = vadd.f32 %v157, %v591
    %v664 = vadd.f32 %v158, %v593
    %v665 = vadd.f32 %v159, %v482
    %v666 = vadd.f32 %v160, %v484
    %v667 = vadd.f32 %v161, %v595
    %v668 = vadd.f32 %v162, %v597
    %v669 = vadd.f32 %v163, %v488
    %v670 = vadd.f32 %v164, %v490
    %v671 = vadd.f32 %v165, %v601
    %v672 = vadd.f32 %v166, %v603
    %v673 = vadd.f32 %v167, %v492
    %v674 = vadd.f32 %v168, %v494
    %v675 = vadd.f32 %v169, %v605
    %v676 = vadd.f32 %v170, %v607
    %v677 = vadd.f32 %v171, %v498
    %v678 = vadd.f32 %v172, %v500
    %v679 = vadd.f32 %v173, %v611
    %v680 = vadd.f32 %v174, %v613
    %v681 = vadd.f32 %v175, %v502
    %v682 = vadd.f32 %v176, %v504
    %v683 = vadd.f32 %v177, %v615
    %v684 = vadd.f32 %v178, %v617
    %v685 = vadd.f32 %v179, %v508
    %v686 = vadd.f32 %v180, %v510
    %v687 = vadd.f32 %v181, %v621
    %v688 = vadd.f32 %v182, %v623
    %v689 = vadd.f32 %v183, %v512
    %v690 = vadd.f32 %v184, %v514
    %v691 = vadd.f32 %v185, %v625
    %v692 = vadd.f32 %v186, %v627
    %693 = vst [vmem:[#allocation2] sm:$0xff] %v629
    %694 = vst [vmem:[#allocation2 + $0x8] sm:$0xff] %v630
    %695 = vst [vmem:[#allocation2 + $0x10] sm:$0xff] %v631
    %696 = vst [vmem:[#allocation2 + $0x18] sm:$0xff] %v632
    %697 = vst [vmem:[#allocation2 + $0x20] sm:$0xff] %v633
    %698 = vst [vmem:[#allocation2 + $0x28] sm:$0xff] %v634
    %699 = vst [vmem:[#allocation2 + $0x30] sm:$0xff] %v635
    %700 = vst [vmem:[#allocation2 + $0x38] sm:$0xff] %v636
    %701 = vst [vmem:[#allocation2 + $0x40] sm:$0xff] %v637
    %702 = vst [vmem:[#allocation2 + $0x48] sm:$0xff] %v638
    %703 = vst [vmem:[#allocation2 + $0x50] sm:$0xff] %v639
    %704 = vst [vmem:[#allocation2 + $0x58] sm:$0xff] %v640
    %705 = vst [vmem:[#allocation2 + $0x60] sm:$0xff] %v641
    %706 = vst [vmem:[#allocation2 + $0x68] sm:$0xff] %v642
    %707 = vst [vmem:[#allocation2 + $0x70] sm:$0xff] %v643
    %708 = vst [vmem:[#allocation2 + $0x78] sm:$0xff] %v644
    %709 = vst [vmem:[#allocation2 + $0x80] sm:$0xff] %v645
    %710 = vst [vmem:[#allocation2 + $0x88] sm:$0xff] %v646
    %711 = vst [vmem:[#allocation2 + $0x90] sm:$0xff] %v647
    %712 = vst [vmem:[#allocation2 + $0x98] sm:$0xff] %v648
    %713 = vst [vmem:[#allocation2 + $0xa0] sm:$0xff] %v649
    %714 = vst [vmem:[#allocation2 + $0xa8] sm:$0xff] %v650
    %715 = vst [vmem:[#allocation2 + $0xb0] sm:$0xff] %v651
    %716 = vst [vmem:[#allocation2 + $0xb8] sm:$0xff] %v652
    %717 = vst [vmem:[#allocation2 + $0xc0] sm:$0xff] %v653
    %718 = vst [vmem:[#allocation2 + $0xc8] sm:$0xff] %v654
    %719 = vst [vmem:[#allocation2 + $0xd0] sm:$0xff] %v655
    %720 = vst [vmem:[#allocation2 + $0xd8] sm:$0xff] %v656
    %721 = vst [vmem:[#allocation2 + $0xe0] sm:$0xff] %v657
    %722 = vst [vmem:[#allocation2 + $0xe8] sm:$0xff] %v658
    %723 = vst [vmem:[#allocation2 + $0xf0] sm:$0xff] %v659
    %724 = vst [vmem:[#allocation2 + $0xf8] sm:$0xff] %v660
    %725 = vst [vmem:[#allocation2 + $0x100] sm:$0xff] %v661
    %726 = vst [vmem:[#allocation2 + $0x108] sm:$0xff] %v662
    %727 = vst [vmem:[#allocation2 + $0x110] sm:$0xff] %v663
    %728 = vst [vmem:[#allocation2 + $0x118] sm:$0xff] %v664
    %729 = vst [vmem:[#allocation2 + $0x120] sm:$0xff] %v665
    %730 = vst [vmem:[#allocation2 + $0x128] sm:$0xff] %v666
    %731 = vst [vmem:[#allocation2 + $0x130] sm:$0xff] %v667
    %732 = vst [vmem:[#allocation2 + $0x138] sm:$0xff] %v668
    %733 = vst [vmem:[#allocation2 + $0x140] sm:$0xff] %v669
    %734 = vst [vmem:[#allocation2 + $0x148] sm:$0xff] %v670
    %735 = vst [vmem:[#allocation2 + $0x150] sm:$0xff] %v671
    %736 = vst [vmem:[#allocation2 + $0x158] sm:$0xff] %v672
    %737 = vst [vmem:[#allocation2 + $0x160] sm:$0xff] %v673
    %738 = vst [vmem:[#allocation2 + $0x168] sm:$0xff] %v674
    %739 = vst [vmem:[#allocation2 + $0x170] sm:$0xff] %v675
    %740 = vst [vmem:[#allocation2 + $0x178] sm:$0xff] %v676
    %741 = vst [vmem:[#allocation2 + $0x180] sm:$0xff] %v677
    %742 = vst [vmem:[#allocation2 + $0x188] sm:$0xff] %v678
    %743 = vst [vmem:[#allocation2 + $0x190] sm:$0xff] %v679
    %744 = vst [vmem:[#allocation2 + $0x198] sm:$0xff] %v680
    %745 = vst [vmem:[#allocation2 + $0x1a0] sm:$0xff] %v681
    %746 = vst [vmem:[#allocation2 + $0x1a8] sm:$0xff] %v682
    %747 = vst [vmem:[#allocation2 + $0x1b0] sm:$0xff] %v683
    %748 = vst [vmem:[#allocation2 + $0x1b8] sm:$0xff] %v684
    %749 = vst [vmem:[#allocation2 + $0x1c0] sm:$0xff] %v685
    %750 = vst [vmem:[#allocation2 + $0x1c8] sm:$0xff] %v686
    %751 = vst [vmem:[#allocation2 + $0x1d0] sm:$0xff] %v687
    %752 = vst [vmem:[#allocation2 + $0x1d8] sm:$0xff] %v688
    %753 = vst [vmem:[#allocation2 + $0x1e0] sm:$0xff] %v689
    %754 = vst [vmem:[#allocation2 + $0x1e8] sm:$0xff] %v690
    %755 = vst [vmem:[#allocation2 + $0x1f0] sm:$0xff] %v691
    %756 = vst [vmem:[#allocation2 + $0x1f8] sm:$0xff] %v692
    // Predicated region
    $region30: #{tpu_custom_call.1} parent=1 // pred_check
      %p757 = pneg %p55
    $region31: #{tpu_custom_call.1} parent=1 // pred_check_branch
      %759 = sbr.rel (%p757) target = $region33
    $region32: #{tpu_custom_call.1} parent=1 // pred_region
      %v760 = vld [vmem:[#allocation2] sm:$0xff]
      %v761 = vld [vmem:[#allocation2 + $0x8] sm:$0xff]
      %v762 = vld [vmem:[#allocation2 + $0x10] sm:$0xff]
      %v763 = vld [vmem:[#allocation2 + $0x18] sm:$0xff]
      %v764 = vld [vmem:[#allocation2 + $0x20] sm:$0xff]
      %v765 = vld [vmem:[#allocation2 + $0x28] sm:$0xff]
      %v766 = vld [vmem:[#allocation2 + $0x30] sm:$0xff]
      %v767 = vld [vmem:[#allocation2 + $0x38] sm:$0xff]
      %v768 = vld [vmem:[#allocation2 + $0x40] sm:$0xff]
      %v769 = vld [vmem:[#allocation2 + $0x48] sm:$0xff]
      %v770 = vld [vmem:[#allocation2 + $0x50] sm:$0xff]
      %v771 = vld [vmem:[#allocation2 + $0x58] sm:$0xff]
      %v772 = vld [vmem:[#allocation2 + $0x60] sm:$0xff]
      %v773 = vld [vmem:[#allocation2 + $0x68] sm:$0xff]
      %v774 = vld [vmem:[#allocation2 + $0x70] sm:$0xff]
      %v775 = vld [vmem:[#allocation2 + $0x78] sm:$0xff]
      %v776 = vld [vmem:[#allocation2 + $0x80] sm:$0xff]
      %v777 = vld [vmem:[#allocation2 + $0x88] sm:$0xff]
      %v778 = vld [vmem:[#allocation2 + $0x90] sm:$0xff]
      %v779 = vld [vmem:[#allocation2 + $0x98] sm:$0xff]
      %v780 = vld [vmem:[#allocation2 + $0xa0] sm:$0xff]
      %v781 = vld [vmem:[#allocation2 + $0xa8] sm:$0xff]
      %v782 = vld [vmem:[#allocation2 + $0xb0] sm:$0xff]
      %v783 = vld [vmem:[#allocation2 + $0xb8] sm:$0xff]
      %v784 = vld [vmem:[#allocation2 + $0xc0] sm:$0xff]
      %v785 = vld [vmem:[#allocation2 + $0xc8] sm:$0xff]
      %v786 = vld [vmem:[#allocation2 + $0xd0] sm:$0xff]
      %v787 = vld [vmem:[#allocation2 + $0xd8] sm:$0xff]
      %v788 = vld [vmem:[#allocation2 + $0xe0] sm:$0xff]
      %v789 = vld [vmem:[#allocation2 + $0xe8] sm:$0xff]
      %v790 = vld [vmem:[#allocation2 + $0xf0] sm:$0xff]
      %v791 = vld [vmem:[#allocation2 + $0xf8] sm:$0xff]
      %v792 = vld [vmem:[#allocation2 + $0x100] sm:$0xff]
      %v793 = vld [vmem:[#allocation2 + $0x108] sm:$0xff]
      %v794 = vld [vmem:[#allocation2 + $0x110] sm:$0xff]
      %v795 = vld [vmem:[#allocation2 + $0x118] sm:$0xff]
      %v796 = vld [vmem:[#allocation2 + $0x120] sm:$0xff]
      %v797 = vld [vmem:[#allocation2 + $0x128] sm:$0xff]
      %v798 = vld [vmem:[#allocation2 + $0x130] sm:$0xff]
      %v799 = vld [vmem:[#allocation2 + $0x138] sm:$0xff]
      %v800 = vld [vmem:[#allocation2 + $0x140] sm:$0xff]
      %v801 = vld [vmem:[#allocation2 + $0x148] sm:$0xff]
      %v802 = vld [vmem:[#allocation2 + $0x150] sm:$0xff]
      %v803 = vld [vmem:[#allocation2 + $0x158] sm:$0xff]
      %v804 = vld [vmem:[#allocation2 + $0x160] sm:$0xff]
      %v805 = vld [vmem:[#allocation2 + $0x168] sm:$0xff]
      %v806 = vld [vmem:[#allocation2 + $0x170] sm:$0xff]
      %v807 = vld [vmem:[#allocation2 + $0x178] sm:$0xff]
      %v808 = vld [vmem:[#allocation2 + $0x180] sm:$0xff]
      %v809 = vld [vmem:[#allocation2 + $0x188] sm:$0xff]
      %v810 = vld [vmem:[#allocation2 + $0x190] sm:$0xff]
      %v811 = vld [vmem:[#allocation2 + $0x198] sm:$0xff]
      %v812 = vld [vmem:[#allocation2 + $0x1a0] sm:$0xff]
      %v813 = vld [vmem:[#allocation2 + $0x1a8] sm:$0xff]
      %v814 = vld [vmem:[#allocation2 + $0x1b0] sm:$0xff]
      %v815 = vld [vmem:[#allocation2 + $0x1b8] sm:$0xff]
      %v816 = vld [vmem:[#allocation2 + $0x1c0] sm:$0xff]
      %v817 = vld [vmem:[#allocation2 + $0x1c8] sm:$0xff]
      %v818 = vld [vmem:[#allocation2 + $0x1d0] sm:$0xff]
      %v819 = vld [vmem:[#allocation2 + $0x1d8] sm:$0xff]
      %v820 = vld [vmem:[#allocation2 + $0x1e0] sm:$0xff]
      %v821 = vld [vmem:[#allocation2 + $0x1e8] sm:$0xff]
      %v822 = vld [vmem:[#allocation2 + $0x1f0] sm:$0xff]
      %v823 = vld [vmem:[#allocation2 + $0x1f8] sm:$0xff]
      %v824 = vld [vmem:[#allocation8] sm:$0xf]
      %v826 = vlaneseq
      %v827 = vshrl.u32 %v826, 7
      %v828 = vsub.s32 0, %v827
      %v829 = vrot.slane %v824, %v828
      %v830 = vlaneseq
      %v831 = vshrl.u32 %v830, 7
      %v832 = vsub.s32 1, %v831
      %v833 = vrot.slane %v824, %v832
      %v834 = vlaneseq
      %v835 = vshrl.u32 %v834, 7
      %v836 = vsub.s32 2, %v835
      %v837 = vrot.slane %v824, %v836
      %v838 = vlaneseq
      %v839 = vshrl.u32 %v838, 7
      %v840 = vsub.s32 3, %v839
      %v841 = vrot.slane %v824, %v840
      %v846 = vadd.f32 %v760, %v829
      %v847 = vadd.f32 %v761, %v833
      %v848 = vadd.f32 %v762, %v837
      %v849 = vadd.f32 %v763, %v841
      %v850 = vadd.f32 %v764, %v829
      %v851 = vadd.f32 %v765, %v833
      %v852 = vadd.f32 %v766, %v837
      %v853 = vadd.f32 %v767, %v841
      %v854 = vadd.f32 %v768, %v829
      %v855 = vadd.f32 %v769, %v833
      %v856 = vadd.f32 %v770, %v837
      %v857 = vadd.f32 %v771, %v841
      %v858 = vadd.f32 %v772, %v829
      %v859 = vadd.f32 %v773, %v833
      %v860 = vadd.f32 %v774, %v837
      %v861 = vadd.f32 %v775, %v841
      %v862 = vadd.f32 %v776, %v829
      %v863 = vadd.f32 %v777, %v833
      %v864 = vadd.f32 %v778, %v837
      %v865 = vadd.f32 %v779, %v841
      %v866 = vadd.f32 %v780, %v829
      %v867 = vadd.f32 %v781, %v833
      %v868 = vadd.f32 %v782, %v837
      %v869 = vadd.f32 %v783, %v841
      %v870 = vadd.f32 %v784, %v829
      %v871 = vadd.f32 %v785, %v833
      %v872 = vadd.f32 %v786, %v837
      %v873 = vadd.f32 %v787, %v841
      %v874 = vadd.f32 %v788, %v829
      %v875 = vadd.f32 %v789, %v833
      %v876 = vadd.f32 %v790, %v837
      %v877 = vadd.f32 %v791, %v841
      %v878 = vadd.f32 %v792, %v829
      %v879 = vadd.f32 %v793, %v833
      %v880 = vadd.f32 %v794, %v837
      %v881 = vadd.f32 %v795, %v841
      %v882 = vadd.f32 %v796, %v829
      %v883 = vadd.f32 %v797, %v833
      %v884 = vadd.f32 %v798, %v837
      %v885 = vadd.f32 %v799, %v841
      %v886 = vadd.f32 %v800, %v829
      %v887 = vadd.f32 %v801, %v833
      %v888 = vadd.f32 %v802, %v837
      %v889 = vadd.f32 %v803, %v841
      %v890 = vadd.f32 %v804, %v829
      %v891 = vadd.f32 %v805, %v833
      %v892 = vadd.f32 %v806, %v837
      %v893 = vadd.f32 %v807, %v841
      %v894 = vadd.f32 %v808, %v829
      %v895 = vadd.f32 %v809, %v833
      %v896 = vadd.f32 %v810, %v837
      %v897 = vadd.f32 %v811, %v841
      %v898 = vadd.f32 %v812, %v829
      %v899 = vadd.f32 %v813, %v833
      %v900 = vadd.f32 %v814, %v837
      %v901 = vadd.f32 %v815, %v841
      %v902 = vadd.f32 %v816, %v829
      %v903 = vadd.f32 %v817, %v833
      %v904 = vadd.f32 %v818, %v837
      %v905 = vadd.f32 %v819, %v841
      %v906 = vadd.f32 %v820, %v829
      %v907 = vadd.f32 %v821, %v833
      %v908 = vadd.f32 %v822, %v837
      %v909 = vadd.f32 %v823, %v841
      %910 = vst [vmem:[#allocation9] sm:$0xff] %v846
      %911 = vst [vmem:[#allocation9 + $0x8] sm:$0xff] %v847
      %912 = vst [vmem:[#allocation9 + $0x10] sm:$0xff] %v848
      %913 = vst [vmem:[#allocation9 + $0x18] sm:$0xff] %v849
      %914 = vst [vmem:[#allocation9 + $0x20] sm:$0xff] %v850
      %915 = vst [vmem:[#allocation9 + $0x28] sm:$0xff] %v851
      %916 = vst [vmem:[#allocation9 + $0x30] sm:$0xff] %v852
      %917 = vst [vmem:[#allocation9 + $0x38] sm:$0xff] %v853
      %918 = vst [vmem:[#allocation9 + $0x40] sm:$0xff] %v854
      %919 = vst [vmem:[#allocation9 + $0x48] sm:$0xff] %v855
      %920 = vst [vmem:[#allocation9 + $0x50] sm:$0xff] %v856
      %921 = vst [vmem:[#allocation9 + $0x58] sm:$0xff] %v857
      %922 = vst [vmem:[#allocation9 + $0x60] sm:$0xff] %v858
      %923 = vst [vmem:[#allocation9 + $0x68] sm:$0xff] %v859
      %924 = vst [vmem:[#allocation9 + $0x70] sm:$0xff] %v860
      %925 = vst [vmem:[#allocation9 + $0x78] sm:$0xff] %v861
      %926 = vst [vmem:[#allocation9 + $0x80] sm:$0xff] %v862
      %927 = vst [vmem:[#allocation9 + $0x88] sm:$0xff] %v863
      %928 = vst [vmem:[#allocation9 + $0x90] sm:$0xff] %v864
      %929 = vst [vmem:[#allocation9 + $0x98] sm:$0xff] %v865
      %930 = vst [vmem:[#allocation9 + $0xa0] sm:$0xff] %v866
      %931 = vst [vmem:[#allocation9 + $0xa8] sm:$0xff] %v867
      %932 = vst [vmem:[#allocation9 + $0xb0] sm:$0xff] %v868
      %933 = vst [vmem:[#allocation9 + $0xb8] sm:$0xff] %v869
      %934 = vst [vmem:[#allocation9 + $0xc0] sm:$0xff] %v870
      %935 = vst [vmem:[#allocation9 + $0xc8] sm:$0xff] %v871
      %936 = vst [vmem:[#allocation9 + $0xd0] sm:$0xff] %v872
      %937 = vst [vmem:[#allocation9 + $0xd8] sm:$0xff] %v873
      %938 = vst [vmem:[#allocation9 + $0xe0] sm:$0xff] %v874
      %939 = vst [vmem:[#allocation9 + $0xe8] sm:$0xff] %v875
      %940 = vst [vmem:[#allocation9 + $0xf0] sm:$0xff] %v876
      %941 = vst [vmem:[#allocation9 + $0xf8] sm:$0xff] %v877
      %942 = vst [vmem:[#allocation9 + $0x100] sm:$0xff] %v878
      %943 = vst [vmem:[#allocation9 + $0x108] sm:$0xff] %v879
      %944 = vst [vmem:[#allocation9 + $0x110] sm:$0xff] %v880
      %945 = vst [vmem:[#allocation9 + $0x118] sm:$0xff] %v881
      %946 = vst [vmem:[#allocation9 + $0x120] sm:$0xff] %v882
      %947 = vst [vmem:[#allocation9 + $0x128] sm:$0xff] %v883
      %948 = vst [vmem:[#allocation9 + $0x130] sm:$0xff] %v884
      %949 = vst [vmem:[#allocation9 + $0x138] sm:$0xff] %v885
      %950 = vst [vmem:[#allocation9 + $0x140] sm:$0xff] %v886
      %951 = vst [vmem:[#allocation9 + $0x148] sm:$0xff] %v887
      %952 = vst [vmem:[#allocation9 + $0x150] sm:$0xff] %v888
      %953 = vst [vmem:[#allocation9 + $0x158] sm:$0xff] %v889
      %954 = vst [vmem:[#allocation9 + $0x160] sm:$0xff] %v890
      %955 = vst [vmem:[#allocation9 + $0x168] sm:$0xff] %v891
      %956 = vst [vmem:[#allocation9 + $0x170] sm:$0xff] %v892
      %957 = vst [vmem:[#allocation9 + $0x178] sm:$0xff] %v893
      %958 = vst [vmem:[#allocation9 + $0x180] sm:$0xff] %v894
      %959 = vst [vmem:[#allocation9 + $0x188] sm:$0xff] %v895
      %960 = vst [vmem:[#allocation9 + $0x190] sm:$0xff] %v896
      %961 = vst [vmem:[#allocation9 + $0x198] sm:$0xff] %v897
      %962 = vst [vmem:[#allocation9 + $0x1a0] sm:$0xff] %v898
      %963 = vst [vmem:[#allocation9 + $0x1a8] sm:$0xff] %v899
      %964 = vst [vmem:[#allocation9 + $0x1b0] sm:$0xff] %v900
      %965 = vst [vmem:[#allocation9 + $0x1b8] sm:$0xff] %v901
      %966 = vst [vmem:[#allocation9 + $0x1c0] sm:$0xff] %v902
      %967 = vst [vmem:[#allocation9 + $0x1c8] sm:$0xff] %v903
      %968 = vst [vmem:[#allocation9 + $0x1d0] sm:$0xff] %v904
      %969 = vst [vmem:[#allocation9 + $0x1d8] sm:$0xff] %v905
      %970 = vst [vmem:[#allocation9 + $0x1e0] sm:$0xff] %v906
      %971 = vst [vmem:[#allocation9 + $0x1e8] sm:$0xff] %v907
      %972 = vst [vmem:[#allocation9 + $0x1f0] sm:$0xff] %v908
      %973 = vst [vmem:[#allocation9 + $0x1f8] sm:$0xff] %v909
    $region33: #{tpu_custom_call.1} parent=1 // pred_fallthru
      _
    // Predicated region
    $region34: #{tpu_custom_call.1} parent=1 // pred_check
      _
    $region35: #{tpu_custom_call.1} parent=1 // pred_check_branch
      %975 = sbr.rel (0) target = $region37
    $region36: #{tpu_custom_call.1} parent=1 // pred_region
      %s977 = ssub.s32 8192, 8192
      %978 = vsyncadd [#allocation5], %s977
      %s979 = sshll.u32 [#allocation9], 4
      %s980 = int_to_ptr.vmem [resolvable:$true] %s979
      %985 = dma.vmem_to_hbm [thread:$0]  %s980, 8192, %s3, [#allocation5], 512, 512, 32
    $region37: #{tpu_custom_call.1} parent=1 // pred_fallthru
      _
    // Predicated region
    $region38: #{tpu_custom_call.1} parent=1 // pred_check
      _
    $region39: #{tpu_custom_call.1} parent=1 // pred_check_branch
      %987 = sbr.rel (0) target = $region41
    $region40: #{tpu_custom_call.1} parent=1 // pred_region
      %988 = dma.done [#allocation5], 8192
    $region41: #{tpu_custom_call.1} parent=1 // pred_fallthru
      _
    %989 = vsyncpa [#allocation4], 1
    %990 = vsyncpa [#allocation7], 1
    %991 = vsyncpa [#allocation5], 1

</llo_original>
